<compile_context>
chip_gen: v7x
topology: tpu7x:2x2x1
jax: 0.10.0
libtpu: 0.0.40
codegen_flags: <defaults>
</compile_context>

<pallas_src>
import functools

import jax
import jax.numpy as jnp
from jax.experimental import pallas as pl
from jax.experimental.pallas import tpu as pltpu

_LANE = 128


def _actor_kernel(x_ref, w1t_ref, b1t_ref, w2t_ref, b2t_ref, wmt_ref, bmt_ref,
                  out_ref, *, act_limit):
    """One batch tile of the SAC actor MLP, fully batch-on-lanes.

    x_ref   : (TB, S)  bf16 state tile (streamed per grid step)
    w1t_ref : (H1, S)  bf16 layer-1 weight, pre-transposed, VMEM-resident
    b1t_ref : (H1, 1)  f32 bias column
    w2t_ref : (H2, H1) bf16
    b2t_ref : (H2, 1)  f32
    wmt_ref : (A, H2)  bf16 mean head, pre-transposed
    bmt_ref : (A, 1)   f32
    out_ref : (A, TB)  f32 transposed output tile -> batch on the lane axis
    """
    x = x_ref[...]  # already compute_dtype (bf16); no in-kernel cast

    # Layer 1: contract S of (H1, S) with S of (TB, S) -> (H1, TB).
    # Batch stays on the 128-lane axis for all subsequent VPU work.
    h1 = jax.lax.dot_general(
        w1t_ref[...], x,
        dimension_numbers=(((1,), (1,)), ((), ())),
        preferred_element_type=jnp.float32)
    h1 = jnp.maximum(h1 + b1t_ref[...], 0.0)

    # Layer 2: (H2, H1) @ (H1, TB) -> (H2, TB).
    h2 = jnp.dot(w2t_ref[...], h1.astype(w2t_ref.dtype),
                 preferred_element_type=jnp.float32)
    h2 = jnp.maximum(h2 + b2t_ref[...], 0.0)

    # Mean head: (A, H2) @ (H2, TB) -> (A, TB).
    mu = jnp.dot(wmt_ref[...], h2.astype(wmt_ref.dtype),
                 preferred_element_type=jnp.float32)
    mu = mu + bmt_ref[...]

    # Squash (EUP) and scale (VPU); lane-dense unmasked store.
    out_ref[...] = (jnp.tanh(mu) * act_limit).astype(out_ref.dtype)


def actor_forward(state, kparams, act_limit, *, batch_tile=4096,
                  min_grid_steps=1, return_transposed=False):
    """Run the Actor forward pass in a single Pallas kernel.

    state          : (B, num_states) float32
    kparams        : dict from prepare_actor_params()
    batch_tile     : max rows per grid step; default large enough that typical
                     eval batches collapse to a single grid step.
    min_grid_steps : set to 2 on v7x so both TensorCores get a batch split.
    return_transposed : if True, return the raw (A, B_pad) kernel slab
                     (lets a downstream consumer skip the epilogue transpose).
    Returns        : (B, num_actions) float32 == tanh(mu) * act_limit
                     (or (A, B_pad) if return_transposed).
    """
    B, S = state.shape
    H1 = kparams["w1t"].shape[0]
    H2 = kparams["w2t"].shape[0]
    A = kparams["wmt"].shape[0]
    compute_dtype = kparams["w1t"].dtype

    # Grid sizing: as few steps as possible (per-step overhead dominates this
    # workload); TB is a multiple of 128 so the batch sits lane-dense in the
    # transposed output store.
    num_steps = max(int(min_grid_steps), int(pl.cdiv(B, batch_tile)))
    TB = int(pl.cdiv(pl.cdiv(B, num_steps), _LANE)) * _LANE
    B_pad = num_steps * TB
    grid = (num_steps,)

    # Pre-cast to the MXU input dtype (numerics unchanged — the kernel fed
    # bf16 to the MXU anyway) and zero-pad the batch.
    state_c = state.astype(compute_dtype)
    if B_pad != B:
        state_c = jnp.pad(state_c, ((0, B_pad - B), (0, 0)))

    # Weights/biases: constant block index -> stay resident in VMEM across
    # all grid steps; only the state and output tiles stream.
    def resident(arr):
        return pl.BlockSpec(arr.shape, lambda i: (0,) * arr.ndim)

    param_bytes = sum(int(v.size) * v.dtype.itemsize for v in kparams.values())
    cost = pl.CostEstimate(
        flops=2 * B_pad * (S * H1 + H1 * H2 + H2 * A),
        transcendentals=B_pad * A,
        bytes_accessed=int(state_c.size) * state_c.dtype.itemsize
        + param_bytes + B_pad * A * 4,
    )

    # Only raise the scoped-VMEM limit if a (huge) tile would exceed the v5e
    # 16 MiB default; at realistic RL batch sizes this never triggers.
    vmem_est = (2 * TB * S * state_c.dtype.itemsize      # double-buffered state
                + 2 * A * TB * 4                          # double-buffered out
                + param_bytes
                + 4 * max(H1, H2) * TB * 4)               # live activations
    compiler_kwargs = dict(dimension_semantics=("parallel",))
    if vmem_est > (16 << 20):
        compiler_kwargs["vmem_limit_bytes"] = min(2 * vmem_est, 100 << 20)

    # NOTE: act_limit is a module constant; baking it as a static float is
    # intended (a traced act_limit would force retracing).
    kernel = functools.partial(_actor_kernel, act_limit=float(act_limit))

    out_t = pl.pallas_call(
        kernel,
        out_shape=jax.ShapeDtypeStruct((A, B_pad), jnp.float32),
        grid=grid,
        in_specs=[
            pl.BlockSpec((TB, S), lambda i: (i, 0)),      # streamed state tile
            resident(kparams["w1t"]), resident(kparams["b1t"]),
            resident(kparams["w2t"]), resident(kparams["b2t"]),
            resident(kparams["wmt"]), resident(kparams["bmt"]),
        ],
        out_specs=pl.BlockSpec((A, TB), lambda i: (0, i)),  # lane-dense output
        compiler_params=pltpu.CompilerParams(**compiler_kwargs),
        cost_estimate=cost,
    )(state_c, kparams["w1t"], kparams["b1t"], kparams["w2t"],
      kparams["b2t"], kparams["wmt"], kparams["bmt"])

    if return_transposed:
        return out_t          # (A, B_pad): consumer can fuse/avoid transpose
    # Tiny (A, B_pad) -> (B, A) transpose + un-pad epilogue.
    return out_t.T[:B]


def init_actor_params(key, num_states, num_actions, num_hidden_l1,
                      num_hidden_l2):
    """f32 'math layout' params mimicking nn.Linear U(-1/sqrt(fan_in), ...).

    Weights are stored (in_features, out_features), i.e. PyTorch weight.T.
    """
    def linear(k, fan_in, fan_out):
        kw, kb = jax.random.split(k)
        bound = 1.0 / jnp.sqrt(jnp.float32(fan_in))
        w = jax.random.uniform(kw, (fan_in, fan_out), jnp.float32,
                               minval=-bound, maxval=bound)
        b = jax.random.uniform(kb, (fan_out,), jnp.float32,
                               minval=-bound, maxval=bound)
        return w, b

    k1, k2, k3 = jax.random.split(key, 3)
    w1, b1 = linear(k1, num_states, num_hidden_l1)
    w2, b2 = linear(k2, num_hidden_l1, num_hidden_l2)
    wm, bm = linear(k3, num_hidden_l2, num_actions)
    # log_std head exists in the module but is unused by forward(); omitted.
    return {"w1": w1, "b1": b1, "w2": w2, "b2": b2, "wm": wm, "bm": bm}


def prepare_actor_params(params, compute_dtype=jnp.bfloat16):
    """Kernel layout: ALL weights pre-transposed so every layer runs
    batch-on-lanes; bf16 weights (MXU-native); f32 biases as columns."""
    return {
        "w1t": params["w1"].T.astype(compute_dtype),          # (H1, S)
        "b1t": params["b1"].reshape(-1, 1).astype(jnp.float32),
        "w2t": params["w2"].T.astype(compute_dtype),          # (H2, H1)
        "b2t": params["b2"].reshape(-1, 1).astype(jnp.float32),
        "wmt": params["wm"].T.astype(compute_dtype),           # (A, H2)
        "bmt": params["bm"].reshape(-1, 1).astype(jnp.float32),
    }


def actor_reference_f32(state, params, act_limit):
    """Pure-f32 PyTorch-equivalent forward."""
    h1 = jnp.maximum(state @ params["w1"] + params["b1"], 0.0)
    h2 = jnp.maximum(h1 @ params["w2"] + params["b2"], 0.0)
    mu = h2 @ params["wm"] + params["bm"]
    return jnp.tanh(mu) * act_limit


def actor_reference_mixed(state, params, act_limit,
                          compute_dtype=jnp.bfloat16):
    """Same mixed precision as the kernel: bf16 matmul inputs, f32 accum."""
    def mm(x, w):
        return jnp.dot(x.astype(compute_dtype), w.astype(compute_dtype),
                       preferred_element_type=jnp.float32)
    h1 = jnp.maximum(mm(state, params["w1"]) + params["b1"], 0.0)
    h2 = jnp.maximum(mm(h1, params["w2"]) + params["b2"], 0.0)
    mu = mm(h2, params["wm"]) + params["bm"]
    return jnp.tanh(mu) * act_limit


if __name__ == "__main__":
    NUM_STATES, NUM_ACTIONS = 16, 4
    HIDDEN_L1, HIDDEN_L2 = 32, 32
    ACT_LIMIT = 2.0
    B = 512

    key = jax.random.PRNGKey(0)
    k_params, k_state = jax.random.split(key)

    math_params = init_actor_params(k_params, NUM_STATES, NUM_ACTIONS,
                                    HIDDEN_L1, HIDDEN_L2)
    kparams = prepare_actor_params(math_params, compute_dtype=jnp.bfloat16)
    state = jax.random.normal(k_state, (B, NUM_STATES), jnp.float32)

    # Default path: collapses to a single grid step (TB = 512).
    out = actor_forward(state, kparams, ACT_LIMIT)
    out = jax.block_until_ready(out)
    assert out.shape == (B, NUM_ACTIONS)

    # Check against a reference doing the same mixed-precision math.
    ref_mixed = actor_reference_mixed(state, math_params, ACT_LIMIT)
    err_mixed = float(jnp.max(jnp.abs(out - ref_mixed)))
    assert jnp.allclose(out, ref_mixed, atol=2e-3, rtol=2e-3), (
        f"mixed-precision mismatch, max abs err = {err_mixed}")

    # Loose check against the pure-f32 PyTorch-equivalent forward
    # (bf16 matmul inputs introduce ~0.4% relative rounding).
    ref_f32 = actor_reference_f32(state, math_params, ACT_LIMIT)
    err_f32 = float(jnp.max(jnp.abs(out - ref_f32)))
    assert jnp.allclose(out, ref_f32, atol=3e-2, rtol=3e-2), (
        f"f32-reference mismatch, max abs err = {err_f32}")

    # Multi-step path (what v7x would use with min_grid_steps=2): 2 tiles of 256.
    out_2step = actor_forward(state, kparams, ACT_LIMIT, batch_tile=256)
    out_2step = jax.block_until_ready(out_2step)
    assert jnp.allclose(out_2step, ref_mixed, atol=2e-3, rtol=2e-3), \
        "multi-step grid mismatch"

    # Tiny-batch path (single-env acting): batch padded to 128 then sliced.
    out_small = actor_forward(state[:3], kparams, ACT_LIMIT)
    out_small = jax.block_until_ready(out_small)
    assert out_small.shape == (3, NUM_ACTIONS)
    assert jnp.allclose(out_small, ref_mixed[:3], atol=2e-3, rtol=2e-3), \
        "tiny-batch mismatch"

    print("KERNEL_OK")
</pallas_src>

<mosaic_0001>
module attributes {stable_mosaic.version = 11 : i64} {
  func.func @_actor_kernel(%arg0: i32, %arg1: memref<512x16xbf16, #tpu.memory_space<vmem>>, %arg2: memref<32x16xbf16, #tpu.memory_space<vmem>>, %arg3: memref<32x1xf32, #tpu.memory_space<vmem>>, %arg4: memref<32x32xbf16, #tpu.memory_space<vmem>>, %arg5: memref<32x1xf32, #tpu.memory_space<vmem>>, %arg6: memref<4x32xbf16, #tpu.memory_space<vmem>>, %arg7: memref<4x1xf32, #tpu.memory_space<vmem>>, %arg8: memref<4x512xf32, #tpu.memory_space<vmem>>) attributes {dimension_semantics = [#tpu.dimension_semantics<parallel>], iteration_bounds = array<i64: 1>, scalar_prefetch = 0 : i64, scratch_operands = 0 : i64, tpu.core_type = #tpu.core_type<tc>, window_params = [{transform_indices = @transform_0, window_bounds = array<i64: 512, 16>}, {pipeline_mode = #tpu.pipeline_mode<synchronous>, transform_indices = @transform_1, window_bounds = array<i64: 32, 16>}, {pipeline_mode = #tpu.pipeline_mode<synchronous>, transform_indices = @transform_2, window_bounds = array<i64: 32, 1>}, {pipeline_mode = #tpu.pipeline_mode<synchronous>, transform_indices = @transform_3, window_bounds = array<i64: 32, 32>}, {pipeline_mode = #tpu.pipeline_mode<synchronous>, transform_indices = @transform_4, window_bounds = array<i64: 32, 1>}, {pipeline_mode = #tpu.pipeline_mode<synchronous>, transform_indices = @transform_5, window_bounds = array<i64: 4, 32>}, {pipeline_mode = #tpu.pipeline_mode<synchronous>, transform_indices = @transform_6, window_bounds = array<i64: 4, 1>}, {transform_indices = @transform_7, window_bounds = array<i64: 4, 512>}]} {
    %c0 = arith.constant 0 : index
    %c0_0 = arith.constant 0 : index
    %0 = vector.load %arg1[%c0, %c0_0] : memref<512x16xbf16, #tpu.memory_space<vmem>>, vector<512x16xbf16>
    %c0_1 = arith.constant 0 : index
    %c0_2 = arith.constant 0 : index
    %1 = vector.load %arg2[%c0_1, %c0_2] : memref<32x16xbf16, #tpu.memory_space<vmem>>, vector<32x16xbf16>
    %cst = arith.constant dense<0.000000e+00> : vector<32x512xf32>
    %2 = tpu.matmul %1, %0, %cst {dimension_numbers = #tpu.dot_dimension_numbers<[1], [1], [0], [0], [0, 0, 1, 0], [], []>} : vector<32x16xbf16>, vector<512x16xbf16>, vector<32x512xf32> -> vector<32x512xf32>
    %c0_3 = arith.constant 0 : index
    %c0_4 = arith.constant 0 : index
    %3 = vector.load %arg3[%c0_3, %c0_4] : memref<32x1xf32, #tpu.memory_space<vmem>>, vector<32x1xf32>
    %4 = vector.broadcast %3 : vector<32x1xf32> to vector<32x512xf32>
    %5 = arith.addf %2, %4 : vector<32x512xf32>
    %cst_5 = arith.constant 0.000000e+00 : f32
    %6 = vector.broadcast %cst_5 : f32 to vector<32x512xf32>
    %7 = arith.maximumf %5, %6 : vector<32x512xf32>
    %c0_6 = arith.constant 0 : index
    %c0_7 = arith.constant 0 : index
    %8 = vector.load %arg4[%c0_6, %c0_7] : memref<32x32xbf16, #tpu.memory_space<vmem>>, vector<32x32xbf16>
    %9 = arith.truncf %7 : vector<32x512xf32> to vector<32x512xbf16>
    %cst_8 = arith.constant dense<0.000000e+00> : vector<32x512xf32>
    %10 = tpu.matmul %8, %9, %cst_8 {dimension_numbers = #tpu.dot_dimension_numbers<[1], [0], [0], [1], [0, 0, 1, 1], [], []>} : vector<32x32xbf16>, vector<32x512xbf16>, vector<32x512xf32> -> vector<32x512xf32>
    %c0_9 = arith.constant 0 : index
    %c0_10 = arith.constant 0 : index
    %11 = vector.load %arg5[%c0_9, %c0_10] : memref<32x1xf32, #tpu.memory_space<vmem>>, vector<32x1xf32>
    %12 = vector.broadcast %11 : vector<32x1xf32> to vector<32x512xf32>
    %13 = arith.addf %10, %12 : vector<32x512xf32>
    %cst_11 = arith.constant 0.000000e+00 : f32
    %14 = vector.broadcast %cst_11 : f32 to vector<32x512xf32>
    %15 = arith.maximumf %13, %14 : vector<32x512xf32>
    %c0_12 = arith.constant 0 : index
    %c0_13 = arith.constant 0 : index
    %16 = vector.load %arg6[%c0_12, %c0_13] : memref<4x32xbf16, #tpu.memory_space<vmem>>, vector<4x32xbf16>
    %17 = arith.truncf %15 : vector<32x512xf32> to vector<32x512xbf16>
    %cst_14 = arith.constant dense<0.000000e+00> : vector<4x512xf32>
    %18 = tpu.matmul %16, %17, %cst_14 {dimension_numbers = #tpu.dot_dimension_numbers<[1], [0], [0], [1], [0, 0, 1, 1], [], []>} : vector<4x32xbf16>, vector<32x512xbf16>, vector<4x512xf32> -> vector<4x512xf32>
    %c0_15 = arith.constant 0 : index
    %c0_16 = arith.constant 0 : index
    %19 = vector.load %arg7[%c0_15, %c0_16] : memref<4x1xf32, #tpu.memory_space<vmem>>, vector<4x1xf32>
    %20 = vector.broadcast %19 : vector<4x1xf32> to vector<4x512xf32>
    %21 = arith.addf %18, %20 : vector<4x512xf32>
    %22 = math.tanh %21 : vector<4x512xf32>
    %cst_17 = arith.constant 2.000000e+00 : f32
    %23 = vector.broadcast %cst_17 : f32 to vector<4x512xf32>
    %24 = arith.mulf %22, %23 : vector<4x512xf32>
    %c0_18 = arith.constant 0 : index
    %c0_19 = arith.constant 0 : index
    %25 = vector.load %arg8[%c0_18, %c0_19] : memref<4x512xf32, #tpu.memory_space<vmem>>, vector<4x512xf32>
    tpu.vector_store %arg8[%c0_18, %c0_19], %24 {strides = array<i32>} : memref<4x512xf32, #tpu.memory_space<vmem>>, vector<4x512xf32>,
    return
  }
  func.func @transform_0(%arg0: i32) -> (i32, i32) {
    %c0_i32 = arith.constant 0 : i32
    %c0_i32_0 = arith.constant 0 : i32
    return %arg0, %c0_i32 : i32, i32
  }
  func.func @transform_1(%arg0: i32) -> (i32, i32) {
    %c0_i32 = arith.constant 0 : i32
    %c0_i32_0 = arith.constant 0 : i32
    %c0_i32_1 = arith.constant 0 : i32
    return %c0_i32, %c0_i32_0 : i32, i32
  }
  func.func @transform_2(%arg0: i32) -> (i32, i32) {
    %c0_i32 = arith.constant 0 : i32
    %c0_i32_0 = arith.constant 0 : i32
    %c0_i32_1 = arith.constant 0 : i32
    return %c0_i32, %c0_i32_0 : i32, i32
  }
  func.func @transform_3(%arg0: i32) -> (i32, i32) {
    %c0_i32 = arith.constant 0 : i32
    %c0_i32_0 = arith.constant 0 : i32
    %c0_i32_1 = arith.constant 0 : i32
    return %c0_i32, %c0_i32_0 : i32, i32
  }
  func.func @transform_4(%arg0: i32) -> (i32, i32) {
    %c0_i32 = arith.constant 0 : i32
    %c0_i32_0 = arith.constant 0 : i32
    %c0_i32_1 = arith.constant 0 : i32
    return %c0_i32, %c0_i32_0 : i32, i32
  }
  func.func @transform_5(%arg0: i32) -> (i32, i32) {
    %c0_i32 = arith.constant 0 : i32
    %c0_i32_0 = arith.constant 0 : i32
    %c0_i32_1 = arith.constant 0 : i32
    return %c0_i32, %c0_i32_0 : i32, i32
  }
  func.func @transform_6(%arg0: i32) -> (i32, i32) {
    %c0_i32 = arith.constant 0 : i32
    %c0_i32_0 = arith.constant 0 : i32
    %c0_i32_1 = arith.constant 0 : i32
    return %c0_i32, %c0_i32_0 : i32, i32
  }
  func.func @transform_7(%arg0: i32) -> (i32, i32) {
    %c0_i32 = arith.constant 0 : i32
    %c0_i32_0 = arith.constant 0 : i32
    return %c0_i32, %arg0 : i32, i32
  }
}

</mosaic_0001>

<llo_original>
// kernel: tpu_custom_call.1
$region0: #{tpu_custom_call.1}
  #allocation0 [shape = 'u32[]', space=smem, size = 0x4, offset = 0x4, fixed_abs, tag = 'smem constant byte address 0x4 - core index']
  #allocation1 [shape = 'u32[144,128]{1,0:T(1,128)}', space=vmem, size = 0x12000, scoped, tag = 'internal scratch']
  %s0 = inlined_call_operand.vmem [shape: bf16[512,16], index: 0, kind: input, shape index: {}]
  %s1 = inlined_call_operand.vmem [shape: bf16[32,16], index: 1, kind: input, shape index: {}]
  %s2 = inlined_call_operand.vmem [shape: f32[32,1], index: 2, kind: input, shape index: {}]
  %s3 = inlined_call_operand.vmem [shape: bf16[32,32], index: 3, kind: input, shape index: {}]
  %s4 = inlined_call_operand.vmem [shape: f32[32,1], index: 4, kind: input, shape index: {}]
  %s5 = inlined_call_operand.vmem [shape: bf16[4,32], index: 5, kind: input, shape index: {}]
  %s6 = inlined_call_operand.vmem [shape: f32[4,1], index: 6, kind: input, shape index: {}]
  %s7 = inlined_call_operand.hbm [shape: f32[4,512], index: 7, kind: output, shape index: {}]
  %s8 = sld [smem:[#allocation0]]
  $region38: #{tpu_custom_call.1} parent=0
    _
  %s10 = ssub.s32 1, %s8
  %s11 = scalar_select 0, %s10, %s8
  $region1: #{tpu_custom_call.1} parent=0
    #allocation2 [shape = 'u8[8192]{0}', space=vmem, size = 0x2000, scoped, tag = 'output window, operand 0, single buffered']
    #allocation3 [shape = 's32[1]{0}', space=sflag, size = 0x4, scoped, tag = 'scoped memory for tpu_custom_call.1']
    %12 = vsyncpa [#allocation3], 0
    // Predicated region
    $region2: #{tpu_custom_call.1} parent=1 // pred_check
      _
    $region3: #{tpu_custom_call.1} parent=1 // pred_check_branch
      %14 = sbr.rel (0) target = $region5
    $region4: #{tpu_custom_call.1} parent=1 // pred_region
      _
    $region5: #{tpu_custom_call.1} parent=1 // pred_fallthru
      _
    // Predicated region
    $region6: #{tpu_custom_call.1} parent=1 // pred_check
      _
    $region7: #{tpu_custom_call.1} parent=1 // pred_check_branch
      %16 = sbr.rel (0) target = $region9
    $region8: #{tpu_custom_call.1} parent=1 // pred_region
      _
    $region9: #{tpu_custom_call.1} parent=1 // pred_fallthru
      _
    // Predicated region
    $region10: #{tpu_custom_call.1} parent=1 // pred_check
      _
    $region11: #{tpu_custom_call.1} parent=1 // pred_check_branch
      %18 = sbr.rel (0) target = $region13
    $region12: #{tpu_custom_call.1} parent=1 // pred_region
      _
    $region13: #{tpu_custom_call.1} parent=1 // pred_fallthru
      _
    // Predicated region
    $region14: #{tpu_custom_call.1} parent=1 // pred_check
      _
    $region15: #{tpu_custom_call.1} parent=1 // pred_check_branch
      %20 = sbr.rel (0) target = $region17
    $region16: #{tpu_custom_call.1} parent=1 // pred_region
      _
    $region17: #{tpu_custom_call.1} parent=1 // pred_fallthru
      _
    // Predicated region
    $region18: #{tpu_custom_call.1} parent=1 // pred_check
      _
    $region19: #{tpu_custom_call.1} parent=1 // pred_check_branch
      %22 = sbr.rel (0) target = $region21
    $region20: #{tpu_custom_call.1} parent=1 // pred_region
      _
    $region21: #{tpu_custom_call.1} parent=1 // pred_fallthru
      _
    // Predicated region
    $region22: #{tpu_custom_call.1} parent=1 // pred_check
      _
    $region23: #{tpu_custom_call.1} parent=1 // pred_check_branch
      %24 = sbr.rel (0) target = $region25
    $region24: #{tpu_custom_call.1} parent=1 // pred_region
      _
    $region25: #{tpu_custom_call.1} parent=1 // pred_fallthru
      _
    // Predicated region
    $region26: #{tpu_custom_call.1} parent=1 // pred_check
      _
    $region27: #{tpu_custom_call.1} parent=1 // pred_check_branch
      %26 = sbr.rel (0) target = $region29
    $region28: #{tpu_custom_call.1} parent=1 // pred_region
      _
    $region29: #{tpu_custom_call.1} parent=1 // pred_fallthru
      _
    %v28 = vld [vmem:[%s0] sm:$0xf]
    %v29 = vld [vmem:[%s0 + $0x4] sm:$0xf]
    %v30 = vld [vmem:[%s0 + $0x8] sm:$0xf]
    %v31 = vld [vmem:[%s0 + $0xc] sm:$0xf]
    %v32 = vld [vmem:[%s0 + $0x10] sm:$0xf]
    %v33 = vld [vmem:[%s0 + $0x14] sm:$0xf]
    %v34 = vld [vmem:[%s0 + $0x18] sm:$0xf]
    %v35 = vld [vmem:[%s0 + $0x1c] sm:$0xf]
    %v36 = vld [vmem:[%s0 + $0x20] sm:$0xf]
    %v37 = vld [vmem:[%s0 + $0x24] sm:$0xf]
    %v38 = vld [vmem:[%s0 + $0x28] sm:$0xf]
    %v39 = vld [vmem:[%s0 + $0x2c] sm:$0xf]
    %v40 = vld [vmem:[%s0 + $0x30] sm:$0xf]
    %v41 = vld [vmem:[%s0 + $0x34] sm:$0xf]
    %v42 = vld [vmem:[%s0 + $0x38] sm:$0xf]
    %v43 = vld [vmem:[%s0 + $0x3c] sm:$0xf]
    %v44 = vld [vmem:[%s0 + $0x40] sm:$0xf]
    %v45 = vld [vmem:[%s0 + $0x44] sm:$0xf]
    %v46 = vld [vmem:[%s0 + $0x48] sm:$0xf]
    %v47 = vld [vmem:[%s0 + $0x4c] sm:$0xf]
    %v48 = vld [vmem:[%s0 + $0x50] sm:$0xf]
    %v49 = vld [vmem:[%s0 + $0x54] sm:$0xf]
    %v50 = vld [vmem:[%s0 + $0x58] sm:$0xf]
    %v51 = vld [vmem:[%s0 + $0x5c] sm:$0xf]
    %v52 = vld [vmem:[%s0 + $0x60] sm:$0xf]
    %v53 = vld [vmem:[%s0 + $0x64] sm:$0xf]
    %v54 = vld [vmem:[%s0 + $0x68] sm:$0xf]
    %v55 = vld [vmem:[%s0 + $0x6c] sm:$0xf]
    %v56 = vld [vmem:[%s0 + $0x70] sm:$0xf]
    %v57 = vld [vmem:[%s0 + $0x74] sm:$0xf]
    %v58 = vld [vmem:[%s0 + $0x78] sm:$0xf]
    %v59 = vld [vmem:[%s0 + $0x7c] sm:$0xf]
    %v60 = vld [vmem:[%s0 + $0x80] sm:$0xf]
    %v61 = vld [vmem:[%s0 + $0x84] sm:$0xf]
    %v62 = vld [vmem:[%s0 + $0x88] sm:$0xf]
    %v63 = vld [vmem:[%s0 + $0x8c] sm:$0xf]
    %v64 = vld [vmem:[%s0 + $0x90] sm:$0xf]
    %v65 = vld [vmem:[%s0 + $0x94] sm:$0xf]
    %v66 = vld [vmem:[%s0 + $0x98] sm:$0xf]
    %v67 = vld [vmem:[%s0 + $0x9c] sm:$0xf]
    %v68 = vld [vmem:[%s0 + $0xa0] sm:$0xf]
    %v69 = vld [vmem:[%s0 + $0xa4] sm:$0xf]
    %v70 = vld [vmem:[%s0 + $0xa8] sm:$0xf]
    %v71 = vld [vmem:[%s0 + $0xac] sm:$0xf]
    %v72 = vld [vmem:[%s0 + $0xb0] sm:$0xf]
    %v73 = vld [vmem:[%s0 + $0xb4] sm:$0xf]
    %v74 = vld [vmem:[%s0 + $0xb8] sm:$0xf]
    %v75 = vld [vmem:[%s0 + $0xbc] sm:$0xf]
    %v76 = vld [vmem:[%s0 + $0xc0] sm:$0xf]
    %v77 = vld [vmem:[%s0 + $0xc4] sm:$0xf]
    %v78 = vld [vmem:[%s0 + $0xc8] sm:$0xf]
    %v79 = vld [vmem:[%s0 + $0xcc] sm:$0xf]
    %v80 = vld [vmem:[%s0 + $0xd0] sm:$0xf]
    %v81 = vld [vmem:[%s0 + $0xd4] sm:$0xf]
    %v82 = vld [vmem:[%s0 + $0xd8] sm:$0xf]
    %v83 = vld [vmem:[%s0 + $0xdc] sm:$0xf]
    %v84 = vld [vmem:[%s0 + $0xe0] sm:$0xf]
    %v85 = vld [vmem:[%s0 + $0xe4] sm:$0xf]
    %v86 = vld [vmem:[%s0 + $0xe8] sm:$0xf]
    %v87 = vld [vmem:[%s0 + $0xec] sm:$0xf]
    %v88 = vld [vmem:[%s0 + $0xf0] sm:$0xf]
    %v89 = vld [vmem:[%s0 + $0xf4] sm:$0xf]
    %v90 = vld [vmem:[%s0 + $0xf8] sm:$0xf]
    %v91 = vld [vmem:[%s0 + $0xfc] sm:$0xf]
    %v92 = vld [vmem:[%s1] sm:$0xf]
    %v93 = vld [vmem:[%s1 + $0x4] sm:$0xf]
    %v94 = vld [vmem:[%s1 + $0x8] sm:$0xf]
    %v95 = vld [vmem:[%s1 + $0xc] sm:$0xf]
    %v96 = vld [vmem:[%s2] sm:$0xff]
    %v97 = vld [vmem:[%s2 + $0x8] sm:$0xff]
    %v98 = vld [vmem:[%s2 + $0x10] sm:$0xff]
    %v99 = vld [vmem:[%s2 + $0x18] sm:$0xff]
    %101 = vset.pattern.permute.xlu0 0
    %102 = vperm.xlu0 %101, %v96
    %v103 = vpop.permute.xlu0 %102
    %106 = vset.pattern.permute.xlu0 0
    %107 = vperm.xlu0 %106, %v97
    %v108 = vpop.permute.xlu0 %107
    %111 = vset.pattern.permute.xlu0 0
    %112 = vperm.xlu0 %111, %v98
    %v113 = vpop.permute.xlu0 %112
    %116 = vset.pattern.permute.xlu0 0
    %117 = vperm.xlu0 %116, %v99
    %v118 = vpop.permute.xlu0 %117
    %v124 = vunpack.c.l.b16 %v92
    %v125 = vunpack.c.l.b16 %v93
    %v126 = vunpack.c.l.b16 %v94
    %v127 = vunpack.c.l.b16 %v95
    %v128 = vpack.c.b16 %v125, %v124
    %v129 = vpack.c.b16 %v127, %v126
    %v194 = vunpack.c.l.b16 %v28
    %v195 = vunpack.c.l.b16 %v29
    %v196 = vunpack.c.l.b16 %v30
    %v197 = vunpack.c.l.b16 %v31
    %v198 = vunpack.c.l.b16 %v32
    %v199 = vunpack.c.l.b16 %v33
    %v200 = vunpack.c.l.b16 %v34
    %v201 = vunpack.c.l.b16 %v35
    %v202 = vunpack.c.l.b16 %v36
    %v203 = vunpack.c.l.b16 %v37
    %v204 = vunpack.c.l.b16 %v38
    %v205 = vunpack.c.l.b16 %v39
    %v206 = vunpack.c.l.b16 %v40
    %v207 = vunpack.c.l.b16 %v41
    %v208 = vunpack.c.l.b16 %v42
    %v209 = vunpack.c.l.b16 %v43
    %v210 = vunpack.c.l.b16 %v44
    %v211 = vunpack.c.l.b16 %v45
    %v212 = vunpack.c.l.b16 %v46
    %v213 = vunpack.c.l.b16 %v47
    %v214 = vunpack.c.l.b16 %v48
    %v215 = vunpack.c.l.b16 %v49
    %v216 = vunpack.c.l.b16 %v50
    %v217 = vunpack.c.l.b16 %v51
    %v218 = vunpack.c.l.b16 %v52
    %v219 = vunpack.c.l.b16 %v53
    %v220 = vunpack.c.l.b16 %v54
    %v221 = vunpack.c.l.b16 %v55
    %v222 = vunpack.c.l.b16 %v56
    %v223 = vunpack.c.l.b16 %v57
    %v224 = vunpack.c.l.b16 %v58
    %v225 = vunpack.c.l.b16 %v59
    %v226 = vunpack.c.l.b16 %v60
    %v227 = vunpack.c.l.b16 %v61
    %v228 = vunpack.c.l.b16 %v62
    %v229 = vunpack.c.l.b16 %v63
    %v230 = vunpack.c.l.b16 %v64
    %v231 = vunpack.c.l.b16 %v65
    %v232 = vunpack.c.l.b16 %v66
    %v233 = vunpack.c.l.b16 %v67
    %v234 = vunpack.c.l.b16 %v68
    %v235 = vunpack.c.l.b16 %v69
    %v236 = vunpack.c.l.b16 %v70
    %v237 = vunpack.c.l.b16 %v71
    %v238 = vunpack.c.l.b16 %v72
    %v239 = vunpack.c.l.b16 %v73
    %v240 = vunpack.c.l.b16 %v74
    %v241 = vunpack.c.l.b16 %v75
    %v242 = vunpack.c.l.b16 %v76
    %v243 = vunpack.c.l.b16 %v77
    %v244 = vunpack.c.l.b16 %v78
    %v245 = vunpack.c.l.b16 %v79
    %v246 = vunpack.c.l.b16 %v80
    %v247 = vunpack.c.l.b16 %v81
    %v248 = vunpack.c.l.b16 %v82
    %v249 = vunpack.c.l.b16 %v83
    %v250 = vunpack.c.l.b16 %v84
    %v251 = vunpack.c.l.b16 %v85
    %v252 = vunpack.c.l.b16 %v86
    %v253 = vunpack.c.l.b16 %v87
    %v254 = vunpack.c.l.b16 %v88
    %v255 = vunpack.c.l.b16 %v89
    %v256 = vunpack.c.l.b16 %v90
    %v257 = vunpack.c.l.b16 %v91
    %v258 = vpack.c.b16 %v195, %v194
    %v259 = vpack.c.b16 %v197, %v196
    %v260 = vpack.c.b16 %v199, %v198
    %v261 = vpack.c.b16 %v201, %v200
    %v262 = vpack.c.b16 %v203, %v202
    %v263 = vpack.c.b16 %v205, %v204
    %v264 = vpack.c.b16 %v207, %v206
    %v265 = vpack.c.b16 %v209, %v208
    %v266 = vpack.c.b16 %v211, %v210
    %v267 = vpack.c.b16 %v213, %v212
    %v268 = vpack.c.b16 %v215, %v214
    %v269 = vpack.c.b16 %v217, %v216
    %v270 = vpack.c.b16 %v219, %v218
    %v271 = vpack.c.b16 %v221, %v220
    %v272 = vpack.c.b16 %v223, %v222
    %v273 = vpack.c.b16 %v225, %v224
    %v274 = vpack.c.b16 %v227, %v226
    %v275 = vpack.c.b16 %v229, %v228
    %v276 = vpack.c.b16 %v231, %v230
    %v277 = vpack.c.b16 %v233, %v232
    %v278 = vpack.c.b16 %v235, %v234
    %v279 = vpack.c.b16 %v237, %v236
    %v280 = vpack.c.b16 %v239, %v238
    %v281 = vpack.c.b16 %v241, %v240
    %v282 = vpack.c.b16 %v243, %v242
    %v283 = vpack.c.b16 %v245, %v244
    %v284 = vpack.c.b16 %v247, %v246
    %v285 = vpack.c.b16 %v249, %v248
    %v286 = vpack.c.b16 %v251, %v250
    %v287 = vpack.c.b16 %v253, %v252
    %v288 = vpack.c.b16 %v255, %v254
    %v289 = vpack.c.b16 %v257, %v256
    %vm290 = vcmask 130048
    %v292 = vsel %vm290, %v128, 0
    %v295 = vsel %vm290, %v129, 0
    %v298 = vsel %vm290, %v258, 0
    %v301 = vsel %vm290, %v259, 0
    %v304 = vsel %vm290, %v260, 0
    %v307 = vsel %vm290, %v261, 0
    %v310 = vsel %vm290, %v262, 0
    %v313 = vsel %vm290, %v263, 0
    %v316 = vsel %vm290, %v264, 0
    %v319 = vsel %vm290, %v265, 0
    %v322 = vsel %vm290, %v266, 0
    %v325 = vsel %vm290, %v267, 0
    %v328 = vsel %vm290, %v268, 0
    %v331 = vsel %vm290, %v269, 0
    %v334 = vsel %vm290, %v270, 0
    %v337 = vsel %vm290, %v271, 0
    %v340 = vsel %vm290, %v272, 0
    %v343 = vsel %vm290, %v273, 0
    %v346 = vsel %vm290, %v274, 0
    %v349 = vsel %vm290, %v275, 0
    %v352 = vsel %vm290, %v276, 0
    %v355 = vsel %vm290, %v277, 0
    %v358 = vsel %vm290, %v278, 0
    %v361 = vsel %vm290, %v279, 0
    %v364 = vsel %vm290, %v280, 0
    %v367 = vsel %vm290, %v281, 0
    %v370 = vsel %vm290, %v282, 0
    %v373 = vsel %vm290, %v283, 0
    %v376 = vsel %vm290, %v284, 0
    %v379 = vsel %vm290, %v285, 0
    %v382 = vsel %vm290, %v286, 0
    %v385 = vsel %vm290, %v287, 0
    %v388 = vsel %vm290, %v288, 0
    %v391 = vsel %vm290, %v289, 0
    %393 = vmatprep.subr.bf16.mxu0 0
    %394 = vmatpush1.bf16.xpose.msra.mxu0 %v298
    %395 = vmatprep.subr.bf16.mxu0 0
    %396 = vmatpush1.bf16.xpose.msra.mxu0 %v301
    %397 = vmatprep.subr.bf16.mxu0 0
    %398 = vmatpush1.bf16.xpose.msra.mxu0 %v304
    %399 = vmatprep.subr.bf16.mxu0 0
    %400 = vmatpush1.bf16.xpose.msra.mxu0 %v307
    %401 = vmatprep.subr.bf16.mxu0 0
    %402 = vmatpush1.bf16.xpose.msra.mxu0 %v310
    %403 = vmatprep.subr.bf16.mxu0 0
    %404 = vmatpush1.bf16.xpose.msra.mxu0 %v313
    %405 = vmatprep.subr.bf16.mxu0 0
    %406 = vmatpush1.bf16.xpose.msra.mxu0 %v316
    %407 = vmatprep.subr.bf16.mxu0 0
    %408 = vmatpush1.bf16.xpose.msra.mxu0 %v319
    %409 = vmatprep.subr.bf16.mxu0 0
    %410 = vmatpush1.bf16.xpose.msra.mxu0 %v322
    %411 = vmatprep.subr.bf16.mxu0 0
    %412 = vmatpush1.bf16.xpose.msra.mxu0 %v325
    %413 = vmatprep.subr.bf16.mxu0 0
    %414 = vmatpush1.bf16.xpose.msra.mxu0 %v328
    %415 = vmatprep.subr.bf16.mxu0 0
    %416 = vmatpush1.bf16.xpose.msra.mxu0 %v331
    %417 = vmatprep.subr.bf16.mxu0 0
    %418 = vmatpush1.bf16.xpose.msra.mxu0 %v334
    %419 = vmatprep.subr.bf16.mxu0 0
    %420 = vmatpush1.bf16.xpose.msra.mxu0 %v337
    %421 = vmatprep.subr.bf16.mxu0 0
    %422 = vmatpush1.bf16.xpose.msra.mxu0 %v340
    %423 = vmatprep.subr.bf16.mxu0 0
    %424 = vmatpush1.bf16.xpose.msra.mxu0 %v343
    %425 = vmatprep.mubr.bf16.mxu0 0
    %426 = vmatmul.mubr.bf16.gmra.mrb[0].mxu0 %v292
    %v427 = vpop.f32.mrb[0].mxu0
    %v428 = vadd.f32 %v103, %v427
    %v429 = vpop.f32.mrb[0].mxu0
    %v430 = vadd.f32 %v103, %v429
    %v431 = vpop.f32.mrb[0].mxu0
    %v432 = vadd.f32 %v108, %v431
    %v433 = vpop.f32.mrb[0].mxu0
    %v434 = vadd.f32 %v108, %v433
    %435 = vmatprep.mubr.bf16.mxu0 0
    %436 = vmatmul.mubr.bf16.gmra.mrb[0].mxu0 %v295
    %v437 = vpop.f32.mrb[0].mxu0
    %v438 = vadd.f32 %v113, %v437
    %v439 = vpop.f32.mrb[0].mxu0
    %v440 = vadd.f32 %v113, %v439
    %v441 = vpop.f32.mrb[0].mxu0
    %v442 = vadd.f32 %v118, %v441
    %v443 = vpop.f32.mrb[0].mxu0
    %v444 = vadd.f32 %v118, %v443
    %445 = vdwg.mxu0
    %446 = vmatprep.subr.bf16.mxu0 0
    %447 = vmatpush1.bf16.xpose.msra.mxu0 %v346
    %448 = vmatprep.subr.bf16.mxu0 0
    %449 = vmatpush1.bf16.xpose.msra.mxu0 %v349
    %450 = vmatprep.subr.bf16.mxu0 0
    %451 = vmatpush1.bf16.xpose.msra.mxu0 %v352
    %452 = vmatprep.subr.bf16.mxu0 0
    %453 = vmatpush1.bf16.xpose.msra.mxu0 %v355
    %454 = vmatprep.subr.bf16.mxu0 0
    %455 = vmatpush1.bf16.xpose.msra.mxu0 %v358
    %456 = vmatprep.subr.bf16.mxu0 0
    %457 = vmatpush1.bf16.xpose.msra.mxu0 %v361
    %458 = vmatprep.subr.bf16.mxu0 0
    %459 = vmatpush1.bf16.xpose.msra.mxu0 %v364
    %460 = vmatprep.subr.bf16.mxu0 0
    %461 = vmatpush1.bf16.xpose.msra.mxu0 %v367
    %462 = vmatprep.subr.bf16.mxu0 0
    %463 = vmatpush1.bf16.xpose.msra.mxu0 %v370
    %464 = vmatprep.subr.bf16.mxu0 0
    %465 = vmatpush1.bf16.xpose.msra.mxu0 %v373
    %466 = vmatprep.subr.bf16.mxu0 0
    %467 = vmatpush1.bf16.xpose.msra.mxu0 %v376
    %468 = vmatprep.subr.bf16.mxu0 0
    %469 = vmatpush1.bf16.xpose.msra.mxu0 %v379
    %470 = vmatprep.subr.bf16.mxu0 0
    %471 = vmatpush1.bf16.xpose.msra.mxu0 %v382
    %472 = vmatprep.subr.bf16.mxu0 0
    %473 = vmatpush1.bf16.xpose.msra.mxu0 %v385
    %474 = vmatprep.subr.bf16.mxu0 0
    %475 = vmatpush1.bf16.xpose.msra.mxu0 %v388
    %476 = vmatprep.subr.bf16.mxu0 0
    %477 = vmatpush1.bf16.xpose.msra.mxu0 %v391
    %478 = vmatprep.mubr.bf16.mxu0 0
    %479 = vmatmul.mubr.bf16.gmra.mrb[0].mxu0 %v292
    %v480 = vpop.f32.mrb[0].mxu0
    %v481 = vadd.f32 %v103, %v480
    %v482 = vpop.f32.mrb[0].mxu0
    %v483 = vadd.f32 %v103, %v482
    %v484 = vpop.f32.mrb[0].mxu0
    %v485 = vadd.f32 %v108, %v484
    %v486 = vpop.f32.mrb[0].mxu0
    %v487 = vadd.f32 %v108, %v486
    %488 = vmatprep.mubr.bf16.mxu0 0
    %489 = vmatmul.mubr.bf16.gmra.mrb[0].mxu0 %v295
    %v490 = vpop.f32.mrb[0].mxu0
    %v491 = vadd.f32 %v113, %v490
    %v492 = vpop.f32.mrb[0].mxu0
    %v493 = vadd.f32 %v113, %v492
    %v494 = vpop.f32.mrb[0].mxu0
    %v495 = vadd.f32 %v118, %v494
    %v496 = vpop.f32.mrb[0].mxu0
    %v497 = vadd.f32 %v118, %v496
    %498 = vdwg.mxu0
    %v499 = vmax.f32 %v428, 0.0
    %v500 = vmax.f32 %v430, 0.0
    %v501 = vmax.f32 %v481, 0.0
    %v502 = vmax.f32 %v483, 0.0
    %v503 = vmax.f32 %v432, 0.0
    %v504 = vmax.f32 %v434, 0.0
    %v505 = vmax.f32 %v485, 0.0
    %v506 = vmax.f32 %v487, 0.0
    %v507 = vmax.f32 %v438, 0.0
    %v508 = vmax.f32 %v440, 0.0
    %v509 = vmax.f32 %v491, 0.0
    %v510 = vmax.f32 %v493, 0.0
    %v511 = vmax.f32 %v442, 0.0
    %v512 = vmax.f32 %v444, 0.0
    %v513 = vmax.f32 %v495, 0.0
    %v514 = vmax.f32 %v497, 0.0
    %v515 = vld [vmem:[%s3] sm:$0xf]
    %v516 = vld [vmem:[%s3 + $0x4] sm:$0xf]
    %v517 = vld [vmem:[%s3 + $0x8] sm:$0xf]
    %v518 = vld [vmem:[%s3 + $0xc] sm:$0xf]
    %v519 = vpack.c.bf16 %v503, %v499
    %v520 = vpack.c.bf16 %v504, %v500
    %v521 = vpack.c.bf16 %v505, %v501
    %v522 = vpack.c.bf16 %v506, %v502
    %v523 = vpack.c.bf16 %v511, %v507
    %v524 = vpack.c.bf16 %v512, %v508
    %v525 = vpack.c.bf16 %v513, %v509
    %v526 = vpack.c.bf16 %v514, %v510
    %v527 = vld [vmem:[%s4] sm:$0xff]
    %v528 = vld [vmem:[%s4 + $0x8] sm:$0xff]
    %v529 = vld [vmem:[%s4 + $0x10] sm:$0xff]
    %v530 = vld [vmem:[%s4 + $0x18] sm:$0xff]
    %532 = vset.pattern.permute.xlu0 0
    %533 = vperm.xlu0 %532, %v527
    %v534 = vpop.permute.xlu0 %533
    %537 = vset.pattern.permute.xlu0 0
    %538 = vperm.xlu0 %537, %v528
    %v539 = vpop.permute.xlu0 %538
    %542 = vset.pattern.permute.xlu0 0
    %543 = vperm.xlu0 %542, %v529
    %v544 = vpop.permute.xlu0 %543
    %547 = vset.pattern.permute.xlu0 0
    %548 = vperm.xlu0 %547, %v530
    %v549 = vpop.permute.xlu0 %548
    %v555 = vunpack.c.l.b16 %v515
    %v556 = vunpack.c.l.b16 %v516
    %v557 = vunpack.c.l.b16 %v517
    %v558 = vunpack.c.l.b16 %v518
    %v559 = vpack.c.b16 %v556, %v555
    %v560 = vpack.c.b16 %v558, %v557
    %vm561 = vcmask 261120
    %v563 = vsel %vm561, %v559, 0
    %v566 = vsel %vm561, %v560, 0
    %568 = vmatprep.subr.bf16.mxu0 %v520
    %569 = vmatpush1.bf16.msra.mxu0 %v519
    %570 = vmatprep.subr.bf16.mxu0 %v524
    %571 = vmatpush1.bf16.msra.mxu0 %v523
    %572 = vmatprep.subr.bf16.mxu0 0
    %573 = vmatpush1.bf16.msra.mxu0 0
    %574 = vmatprep.subr.bf16.mxu0 0
    %575 = vmatpush1.bf16.msra.mxu0 0
    %576 = vmatprep.subr.bf16.mxu0 0
    %577 = vmatpush1.bf16.msra.mxu0 0
    %578 = vmatprep.subr.bf16.mxu0 0
    %579 = vmatpush1.bf16.msra.mxu0 0
    %580 = vmatprep.subr.bf16.mxu0 0
    %581 = vmatpush1.bf16.msra.mxu0 0
    %582 = vmatprep.subr.bf16.mxu0 0
    %583 = vmatpush1.bf16.msra.mxu0 0
    %584 = vmatprep.subr.bf16.mxu0 0
    %585 = vmatpush1.bf16.msra.mxu0 0
    %586 = vmatprep.subr.bf16.mxu0 0
    %587 = vmatpush1.bf16.msra.mxu0 0
    %588 = vmatprep.subr.bf16.mxu0 0
    %589 = vmatpush1.bf16.msra.mxu0 0
    %590 = vmatprep.subr.bf16.mxu0 0
    %591 = vmatpush1.bf16.msra.mxu0 0
    %592 = vmatprep.subr.bf16.mxu0 0
    %593 = vmatpush1.bf16.msra.mxu0 0
    %594 = vmatprep.subr.bf16.mxu0 0
    %595 = vmatpush1.bf16.msra.mxu0 0
    %596 = vmatprep.subr.bf16.mxu0 0
    %597 = vmatpush1.bf16.msra.mxu0 0
    %598 = vmatprep.subr.bf16.mxu0 0
    %599 = vmatpush1.bf16.msra.mxu0 0
    %600 = vmatprep.mubr.bf16.mxu0 0
    %601 = vmatmul.mubr.bf16.gmra.mrb[0].mxu0 %v563
    %v602 = vpop.f32.mrb[0].mxu0
    %v603 = vadd.f32 %v534, %v602
    %v604 = vpop.f32.mrb[0].mxu0
    %v605 = vadd.f32 %v534, %v604
    %v606 = vpop.f32.mrb[0].mxu0
    %v607 = vadd.f32 %v539, %v606
    %v608 = vpop.f32.mrb[0].mxu0
    %v609 = vadd.f32 %v539, %v608
    %610 = vmatprep.mubr.bf16.mxu0 0
    %611 = vmatmul.mubr.bf16.gmra.mrb[0].mxu0 %v566
    %v612 = vpop.f32.mrb[0].mxu0
    %v613 = vadd.f32 %v544, %v612
    %v614 = vpop.f32.mrb[0].mxu0
    %v615 = vadd.f32 %v544, %v614
    %v616 = vpop.f32.mrb[0].mxu0
    %v617 = vadd.f32 %v549, %v616
    %v618 = vpop.f32.mrb[0].mxu0
    %v619 = vadd.f32 %v549, %v618
    %620 = vdwg.mxu0
    %621 = vmatprep.subr.bf16.mxu0 %v522
    %622 = vmatpush1.bf16.msra.mxu0 %v521
    %623 = vmatprep.subr.bf16.mxu0 %v526
    %624 = vmatpush1.bf16.msra.mxu0 %v525
    %625 = vmatprep.subr.bf16.mxu0 0
    %626 = vmatpush1.bf16.msra.mxu0 0
    %627 = vmatprep.subr.bf16.mxu0 0
    %628 = vmatpush1.bf16.msra.mxu0 0
    %629 = vmatprep.subr.bf16.mxu0 0
    %630 = vmatpush1.bf16.msra.mxu0 0
    %631 = vmatprep.subr.bf16.mxu0 0
    %632 = vmatpush1.bf16.msra.mxu0 0
    %633 = vmatprep.subr.bf16.mxu0 0
    %634 = vmatpush1.bf16.msra.mxu0 0
    %635 = vmatprep.subr.bf16.mxu0 0
    %636 = vmatpush1.bf16.msra.mxu0 0
    %637 = vmatprep.subr.bf16.mxu0 0
    %638 = vmatpush1.bf16.msra.mxu0 0
    %639 = vmatprep.subr.bf16.mxu0 0
    %640 = vmatpush1.bf16.msra.mxu0 0
    %641 = vmatprep.subr.bf16.mxu0 0
    %642 = vmatpush1.bf16.msra.mxu0 0
    %643 = vmatprep.subr.bf16.mxu0 0
    %644 = vmatpush1.bf16.msra.mxu0 0
    %645 = vmatprep.subr.bf16.mxu0 0
    %646 = vmatpush1.bf16.msra.mxu0 0
    %647 = vmatprep.subr.bf16.mxu0 0
    %648 = vmatpush1.bf16.msra.mxu0 0
    %649 = vmatprep.subr.bf16.mxu0 0
    %650 = vmatpush1.bf16.msra.mxu0 0
    %651 = vmatprep.subr.bf16.mxu0 0
    %652 = vmatpush1.bf16.msra.mxu0 0
    %653 = vmatprep.mubr.bf16.mxu0 0
    %654 = vmatmul.mubr.bf16.gmra.mrb[0].mxu0 %v563
    %v655 = vpop.f32.mrb[0].mxu0
    %v656 = vadd.f32 %v534, %v655
    %v657 = vpop.f32.mrb[0].mxu0
    %v658 = vadd.f32 %v534, %v657
    %v659 = vpop.f32.mrb[0].mxu0
    %v660 = vadd.f32 %v539, %v659
    %v661 = vpop.f32.mrb[0].mxu0
    %v662 = vadd.f32 %v539, %v661
    %663 = vmatprep.mubr.bf16.mxu0 0
    %664 = vmatmul.mubr.bf16.gmra.mrb[0].mxu0 %v566
    %v665 = vpop.f32.mrb[0].mxu0
    %v666 = vadd.f32 %v544, %v665
    %v667 = vpop.f32.mrb[0].mxu0
    %v668 = vadd.f32 %v544, %v667
    %v669 = vpop.f32.mrb[0].mxu0
    %v670 = vadd.f32 %v549, %v669
    %v671 = vpop.f32.mrb[0].mxu0
    %v672 = vadd.f32 %v549, %v671
    %673 = vdwg.mxu0
    %v674 = vmax.f32 %v603, 0.0
    %v675 = vmax.f32 %v605, 0.0
    %v676 = vmax.f32 %v656, 0.0
    %v677 = vmax.f32 %v658, 0.0
    %v678 = vmax.f32 %v607, 0.0
    %v679 = vmax.f32 %v609, 0.0
    %v680 = vmax.f32 %v660, 0.0
    %v681 = vmax.f32 %v662, 0.0
    %v682 = vmax.f32 %v613, 0.0
    %v683 = vmax.f32 %v615, 0.0
    %v684 = vmax.f32 %v666, 0.0
    %v685 = vmax.f32 %v668, 0.0
    %v686 = vmax.f32 %v617, 0.0
    %v687 = vmax.f32 %v619, 0.0
    %v688 = vmax.f32 %v670, 0.0
    %v689 = vmax.f32 %v672, 0.0
    %v690 = vld [vmem:[%s5] sm:$0x3]
    %v691 = vpack.c.bf16 %v678, %v674
    %v692 = vpack.c.bf16 %v679, %v675
    %v693 = vpack.c.bf16 %v680, %v676
    %v694 = vpack.c.bf16 %v681, %v677
    %v695 = vpack.c.bf16 %v686, %v682
    %v696 = vpack.c.bf16 %v687, %v683
    %v697 = vpack.c.bf16 %v688, %v684
    %v698 = vpack.c.bf16 %v689, %v685
    %v699 = vld [vmem:[%s6] sm:$0xf]
    %701 = vset.pattern.permute.xlu0 0
    %702 = vperm.xlu0 %701, %v699
    %v703 = vpop.permute.xlu0 %702
    %v706 = vsel %vm561, %v690, 0
    %708 = vmatprep.subr.bf16.mxu0 %v692
    %709 = vmatpush1.bf16.msra.mxu0 %v691
    %710 = vmatprep.subr.bf16.mxu0 %v696
    %711 = vmatpush1.bf16.msra.mxu0 %v695
    %712 = vmatprep.subr.bf16.mxu0 0
    %713 = vmatpush1.bf16.msra.mxu0 0
    %714 = vmatprep.subr.bf16.mxu0 0
    %715 = vmatpush1.bf16.msra.mxu0 0
    %716 = vmatprep.subr.bf16.mxu0 0
    %717 = vmatpush1.bf16.msra.mxu0 0
    %718 = vmatprep.subr.bf16.mxu0 0
    %719 = vmatpush1.bf16.msra.mxu0 0
    %720 = vmatprep.subr.bf16.mxu0 0
    %721 = vmatpush1.bf16.msra.mxu0 0
    %722 = vmatprep.subr.bf16.mxu0 0
    %723 = vmatpush1.bf16.msra.mxu0 0
    %724 = vmatprep.subr.bf16.mxu0 0
    %725 = vmatpush1.bf16.msra.mxu0 0
    %726 = vmatprep.subr.bf16.mxu0 0
    %727 = vmatpush1.bf16.msra.mxu0 0
    %728 = vmatprep.subr.bf16.mxu0 0
    %729 = vmatpush1.bf16.msra.mxu0 0
    %730 = vmatprep.subr.bf16.mxu0 0
    %731 = vmatpush1.bf16.msra.mxu0 0
    %732 = vmatprep.subr.bf16.mxu0 0
    %733 = vmatpush1.bf16.msra.mxu0 0
    %734 = vmatprep.subr.bf16.mxu0 0
    %735 = vmatpush1.bf16.msra.mxu0 0
    %736 = vmatprep.subr.bf16.mxu0 0
    %737 = vmatpush1.bf16.msra.mxu0 0
    %738 = vmatprep.subr.bf16.mxu0 0
    %739 = vmatpush1.bf16.msra.mxu0 0
    %740 = vmatprep.mubr.bf16.mxu0 0
    %741 = vmatmul.mubr.bf16.gmra.mrb[0].mxu0 %v706
    %v742 = vpop.f32.mrb[0].mxu0
    %v743 = vadd.f32 %v703, %v742
    %v744 = vpop.f32.mrb[0].mxu0
    %v745 = vadd.f32 %v703, %v744
    %v746 = vpop.f32.mrb[0].mxu0
    %v747 = vpop.f32.mrb[0].mxu0
    %748 = vdwg.mxu0
    %749 = vmatprep.subr.bf16.mxu0 %v694
    %750 = vmatpush1.bf16.msra.mxu0 %v693
    %751 = vmatprep.subr.bf16.mxu0 %v698
    %752 = vmatpush1.bf16.msra.mxu0 %v697
    %753 = vmatprep.subr.bf16.mxu0 0
    %754 = vmatpush1.bf16.msra.mxu0 0
    %755 = vmatprep.subr.bf16.mxu0 0
    %756 = vmatpush1.bf16.msra.mxu0 0
    %757 = vmatprep.subr.bf16.mxu0 0
    %758 = vmatpush1.bf16.msra.mxu0 0
    %759 = vmatprep.subr.bf16.mxu0 0
    %760 = vmatpush1.bf16.msra.mxu0 0
    %761 = vmatprep.subr.bf16.mxu0 0
    %762 = vmatpush1.bf16.msra.mxu0 0
    %763 = vmatprep.subr.bf16.mxu0 0
    %764 = vmatpush1.bf16.msra.mxu0 0
    %765 = vmatprep.subr.bf16.mxu0 0
    %766 = vmatpush1.bf16.msra.mxu0 0
    %767 = vmatprep.subr.bf16.mxu0 0
    %768 = vmatpush1.bf16.msra.mxu0 0
    %769 = vmatprep.subr.bf16.mxu0 0
    %770 = vmatpush1.bf16.msra.mxu0 0
    %771 = vmatprep.subr.bf16.mxu0 0
    %772 = vmatpush1.bf16.msra.mxu0 0
    %773 = vmatprep.subr.bf16.mxu0 0
    %774 = vmatpush1.bf16.msra.mxu0 0
    %775 = vmatprep.subr.bf16.mxu0 0
    %776 = vmatpush1.bf16.msra.mxu0 0
    %777 = vmatprep.subr.bf16.mxu0 0
    %778 = vmatpush1.bf16.msra.mxu0 0
    %779 = vmatprep.subr.bf16.mxu0 0
    %780 = vmatpush1.bf16.msra.mxu0 0
    %781 = vmatprep.mubr.bf16.mxu0 0
    %782 = vmatmul.mubr.bf16.gmra.mrb[0].mxu0 %v706
    %v783 = vpop.f32.mrb[0].mxu0
    %v784 = vadd.f32 %v703, %v783
    %v785 = vpop.f32.mrb[0].mxu0
    %v786 = vadd.f32 %v703, %v785
    %v787 = vpop.f32.mrb[0].mxu0
    %v788 = vpop.f32.mrb[0].mxu0
    %789 = vdwg.mxu0
    %v790 = vtanh.pop %v743
    %v791 = vtanh.pop %v745
    %v792 = vtanh.pop %v784
    %v793 = vtanh.pop %v786
    %v794 = vmul.f32 %v790, 2.0
    %v795 = vmul.f32 %v791, 2.0
    %v796 = vmul.f32 %v792, 2.0
    %v797 = vmul.f32 %v793, 2.0
    %v802 = vcombine.low %v794, %v795
    %v803 = vcombine.low %v796, %v797
    %806 = vst [vmem:[#allocation2] sm:$0xff] %v802
    %807 = vst [vmem:[#allocation2 + $0x8] sm:$0xff] %v803
    // Predicated region
    $region30: #{tpu_custom_call.1} parent=1 // pred_check
      _
    $region31: #{tpu_custom_call.1} parent=1 // pred_check_branch
      %809 = sbr.rel (0) target = $region33
    $region32: #{tpu_custom_call.1} parent=1 // pred_region
      %s811 = ssub.s32 256, 256
      %812 = vsyncadd [#allocation3], %s811
      %s814 = sshll.u32 [#allocation2], 4
      %s815 = int_to_ptr.vmem [resolvable:$true] %s814
      %817 = dma.vmem_to_hbm [thread:$0]  %s815, 256, %s7, [#allocation3]
    $region33: #{tpu_custom_call.1} parent=1 // pred_fallthru
      _
    // Predicated region
    $region34: #{tpu_custom_call.1} parent=1 // pred_check
      _
    $region35: #{tpu_custom_call.1} parent=1 // pred_check_branch
      %819 = sbr.rel (0) target = $region37
    $region36: #{tpu_custom_call.1} parent=1 // pred_region
      %820 = dma.done [#allocation3], 256
    $region37: #{tpu_custom_call.1} parent=1 // pred_fallthru
      _
    %821 = vsyncpa [#allocation3], 1

</llo_original>
